<compile_context>
chip_gen: v5e
topology: v5e:2x2
jax: 0.10.0
libtpu: 0.0.40
codegen_flags: <defaults>
</compile_context>

<pallas_src>
import functools

import jax
import jax.numpy as jnp
from jax.experimental import pallas as pl
from jax.experimental.pallas import tpu as pltpu

_SUB = 8      # sublanes per vreg
_C = 512      # slab lane width (4 x 128 lanes)


def _cdiv(a, b):
    return (a + b - 1) // b


def _round_up(n, m):
    return ((n + m - 1) // m) * m


def linreg_kernel(params_ref, xt_ref, o_ref):
    # params_ref: SMEM (3,) f32 = [w0, w1, b]
    # xt_ref:     VMEM (2, TR, C) tile; xt_ref[0] = feature-0 plane, xt_ref[1] = feature-1
    # o_ref:      VMEM (TR, C) output tile (full (8,128) vregs, unmasked stores)
    w0 = params_ref[0]
    w1 = params_ref[1]
    b = params_ref[2]
    o_ref[...] = w0 * xt_ref[0] + w1 * xt_ref[1] + b


def _pick_tiling(N, block_n):
    """Return (grid, block_rows, total_rows) for the (R, _C) output slab."""
    r_min = _round_up(_cdiv(N, _C), _SUB)                   # rows needed, multiple of 8
    tr_target = max(_SUB, _round_up(block_n // _C, _SUB))   # ~block_n elements per block
    g = max(2, _cdiv(r_min, tr_target))                     # at least 2 grid steps
    g += g % 2                                               # even grid: splits over 2 TCs (v7x)
    tr = _round_up(_cdiv(r_min, g), _SUB)                   # block rows, multiple of 8
    return g, tr, g * tr


@functools.partial(jax.jit, static_argnames=("block_n",))
def linear_regression_forward(x, W, b, *, block_n=_C * 1024):
    """y = x @ W + b for x:(N, 2), W:(2, 1), b:(1, 1) -> (N, 1)."""
    N = x.shape[0]
    g, tr, r = _pick_tiling(N, block_n)
    n_pad = r * _C

    # One contiguous tail pad on the row axis, then a single transpose+reshape into the
    # dense (2, R, C) slab (row i of x lands at slab position (i // C, i % C)).
    x_pad = jnp.pad(x.astype(jnp.float32), ((0, n_pad - N), (0, 0)))
    x_slab = x_pad.T.reshape(2, r, _C)

    # W and b as 3 SMEM scalars instead of tiny (padded) VMEM tiles.
    params = jnp.concatenate(
        [jnp.reshape(W, (-1,)), jnp.reshape(b, (-1,))]).astype(jnp.float32)  # [w0, w1, b]

    out_slab = pl.pallas_call(
        linreg_kernel,
        out_shape=jax.ShapeDtypeStruct((r, _C), jnp.float32),
        grid=(g,),
        in_specs=[
            pl.BlockSpec(memory_space=pltpu.SMEM),             # [w0, w1, b] scalars
            pl.BlockSpec((2, tr, _C), lambda i: (0, i, 0)),    # x slab tile (dense)
        ],
        out_specs=pl.BlockSpec((tr, _C), lambda i: (i, 0)),    # y slab tile (dense)
        compiler_params=pltpu.CompilerParams(
            dimension_semantics=("parallel",)),                # shards across v7x's 2 TCs
    )(params, x_slab)

    # Back to the PyTorch (N, 1) layout: (r, C) -> (n_pad, 1) is a free row-major
    # reshape; the [:N] slice drops the padded tail rows (which just computed b).
    return out_slab.reshape(n_pad, 1)[:N]


if __name__ == "__main__":
    # Parameters exactly as in the PyTorch module __init__.
    W = jnp.array([[0.0], [0.0]], dtype=jnp.float32)
    b = jnp.array([[-5.0]], dtype=jnp.float32)

    key = jax.random.PRNGKey(0)
    k1, k2 = jax.random.split(key)

    # Small deterministic input: batch of 8 rows, 2 features each.
    x_small = jax.random.normal(k1, (8, 2), dtype=jnp.float32)
    out_small = jax.block_until_ready(linear_regression_forward(x_small, W, b))
    ref_small = x_small @ W + b
    assert out_small.shape == (8, 1)
    assert jnp.allclose(out_small, ref_small, atol=1e-6), "mismatch vs reference (module params)"

    # Nonzero-W check so the x @ W term is actually exercised, with a batch size that is
    # not a multiple of the slab width (exercises the multi-step grid + padded-tail path).
    W_nz = jnp.array([[1.5], [-2.25]], dtype=jnp.float32)
    b_nz = jnp.array([[0.75]], dtype=jnp.float32)
    x_big = jax.random.normal(k2, (1000, 2), dtype=jnp.float32)
    out_big = jax.block_until_ready(
        linear_regression_forward(x_big, W_nz, b_nz, block_n=4096))
    ref_big = x_big @ W_nz + b_nz
    assert out_big.shape == (1000, 1)
    assert jnp.allclose(out_big, ref_big, atol=1e-5), "mismatch vs reference (nonzero W, grid path)"

    print("KERNEL_OK")
</pallas_src>

<mosaic_0001>
module attributes {stable_mosaic.version = 11 : i64} {
  func.func @linreg_kernel(%arg0: i32, %arg1: memref<3xf32, #tpu.memory_space<smem>>, %arg2: memref<2x8x512xf32, #tpu.memory_space<vmem>>, %arg3: memref<8x512xf32, #tpu.memory_space<vmem>>) attributes {dimension_semantics = [#tpu.dimension_semantics<parallel>], iteration_bounds = array<i64: 2>, scalar_prefetch = 0 : i64, scratch_operands = 0 : i64, tpu.core_type = #tpu.core_type<tc>, window_params = [{transform_indices = @transform_0, window_bounds = array<i64: 3>}, {transform_indices = @transform_1, window_bounds = array<i64: 2, 8, 512>}, {transform_indices = @transform_2, window_bounds = array<i64: 8, 512>}]} {
    %c0 = arith.constant 0 : index
    %0 = memref.load %arg1[%c0] : memref<3xf32, #tpu.memory_space<smem>>
    %c1 = arith.constant 1 : index
    %1 = memref.load %arg1[%c1] : memref<3xf32, #tpu.memory_space<smem>>
    %c2 = arith.constant 2 : index
    %2 = memref.load %arg1[%c2] : memref<3xf32, #tpu.memory_space<smem>>
    %c0_0 = arith.constant 0 : index
    %c0_1 = arith.constant 0 : index
    %c0_2 = arith.constant 0 : index
    %3 = vector.load %arg2[%c0_0, %c0_1, %c0_2] : memref<2x8x512xf32, #tpu.memory_space<vmem>>, vector<1x8x512xf32>
    %4 = vector.shape_cast %3 : vector<1x8x512xf32> to vector<8x512xf32>
    %5 = vector.broadcast %0 : f32 to vector<8x512xf32>
    %6 = arith.mulf %5, %4 : vector<8x512xf32>
    %c1_3 = arith.constant 1 : index
    %c0_4 = arith.constant 0 : index
    %c0_5 = arith.constant 0 : index
    %7 = vector.load %arg2[%c1_3, %c0_4, %c0_5] : memref<2x8x512xf32, #tpu.memory_space<vmem>>, vector<1x8x512xf32>
    %8 = vector.shape_cast %7 : vector<1x8x512xf32> to vector<8x512xf32>
    %9 = vector.broadcast %1 : f32 to vector<8x512xf32>
    %10 = arith.mulf %9, %8 : vector<8x512xf32>
    %11 = arith.addf %6, %10 : vector<8x512xf32>
    %12 = vector.broadcast %2 : f32 to vector<8x512xf32>
    %13 = arith.addf %11, %12 : vector<8x512xf32>
    %c0_6 = arith.constant 0 : index
    %c0_7 = arith.constant 0 : index
    %14 = vector.load %arg3[%c0_6, %c0_7] : memref<8x512xf32, #tpu.memory_space<vmem>>, vector<8x512xf32>
    tpu.vector_store %arg3[%c0_6, %c0_7], %13 {strides = array<i32>} : memref<8x512xf32, #tpu.memory_space<vmem>>, vector<8x512xf32>,
    return
  }
  func.func @transform_0(%arg0: i32) -> i32 {
    %c0_i32 = arith.constant 0 : i32
    %c0_i32_0 = arith.constant 0 : i32
    return %c0_i32 : i32
  }
  func.func @transform_1(%arg0: i32) -> (i32, i32, i32) {
    %c0_i32 = arith.constant 0 : i32
    %c0_i32_0 = arith.constant 0 : i32
    %c0_i32_1 = arith.constant 0 : i32
    return %c0_i32, %arg0, %c0_i32_0 : i32, i32, i32
  }
  func.func @transform_2(%arg0: i32) -> (i32, i32) {
    %c0_i32 = arith.constant 0 : i32
    %c0_i32_0 = arith.constant 0 : i32
    return %arg0, %c0_i32 : i32, i32
  }
}

</mosaic_0001>

<llo_original>
// kernel: linear_regression_forward.1
$region0: #{linear_regression_forward.1}
  #allocation0 [shape = 'u32[]', space=smem, size = 0x4, offset = 0x4, fixed_abs, tag = 'smem constant byte address 0x4 - core index']
  #allocation1 [shape = 'u32[72,128]{1,0:T(1,128)}', space=vmem, size = 0x9000, scoped, tag = 'internal scratch']
  %s0 = inlined_call_operand.vmem [shape: f32[3], index: 0, kind: input, shape index: {}]
  %s1 = inlined_call_operand.vmem [shape: f32[2,16,512], index: 1, kind: input, shape index: {}]
  %s2 = inlined_call_operand.vmem [shape: f32[16,512], index: 2, kind: output, shape index: {}]
  %s3 = sld [smem:[#allocation0]]
  $region68: #{linear_regression_forward.1} parent=0
    _
  %s5 = ssub.s32 1, %s3
  %s6 = scalar_select 0, %s5, %s3
  $region1: #{linear_regression_forward.1} parent=0
    #allocation2 [shape = 'u8[512]{0}', space=smem, size = 0x200, scoped, tag = 'input window, operand 0, single buffered']
    #allocation3 [shape = 's32[2]{0}', space=sflag, size = 0x8, scoped, tag = 'scoped memory for linear_regression_forward.1']
    #allocation4 [shape = 'u8[65536]{0}', space=vmem, size = 0x10000, scoped, tag = 'input window, operand 1']
    %7 = vsyncpa [#allocation3], 0
    loop: start=0, step=1, limit=4
    $region2: #{linear_regression_forward.1} parent=1 // loop_pre_header
      _
    $region3: #{linear_regression_forward.1} parent=1 // loop_header
      %s9 = sphi 0, %s13
      %p10 = scmp.ge.s32.totalorder %s9, 4
      %s17 = sphi 0, %s17
      %s19 = sphi 0, %s17
      %s20 = sphi 0, %s19
      %s34 = sphi 0, %s20
      %s40 = sphi 0, %s42
      %s43 = sphi 0, %s40
      %s44 = sphi 0, %s43
      %s60 = sphi 0, %s44
      %s66 = sphi 0, %s68
      %s69 = sphi 0, %s66
      %s70 = sphi 0, %s69
      %s86 = sphi 0, %s70
    $region4: #{linear_regression_forward.1} parent=1 // loop_header_branch
      %12 = sbr.rel (%p10) target = $region8
    $region5: #{linear_regression_forward.1} parent=1 // loop_body
      %s14 = ssub.s32 %s9, 1
      %s15 = ssub.s32 %s9, 2
      %s16 = sadd.s32 %s9, 1
      %s18 = sadd.s32 %s17, 1
      %p21 = scmp.eq.s32.totalorder %s9, 1
      %p22 = scmp.ne.s32.totalorder %s17, %s19
      %p23 = scmp.eq.s32.totalorder %s9, 0
      %p24 = por %p22, %p23
      %p25 = scmp.ne.s32.totalorder %s17, %s19
      %p26 = scmp.eq.s32.totalorder %s14, 1
      %p27 = por %p25, %p26
      %p28 = scmp.ne.s32.totalorder %s19, %s20
      %p29 = scmp.eq.s32.totalorder %s14, 0
      %p30 = por %p28, %p29
      %p31 = scmp.ne.s32.totalorder %s19, %s20
      %p32 = scmp.eq.s32.totalorder %s15, 1
      %p33 = por %p31, %p32
      %p35 = scmp.ne.s32.totalorder %s20, %s34
      %p36 = scmp.eq.s32.totalorder %s15, 0
      %p37 = por %p35, %p36
      %s38 = ssub.s32 %s9, %s16
      %p39 = scmp.eq.s32.totalorder %s38, 0
      %s41 = sadd.s32 %s40, 1
      %s42 = scalar_select %p39, %s40, %s41
      %p45 = pneg %p39
      %p46 = scmp.eq.s32.totalorder %s9, 1
      %p47 = por %p45, %p46
      %p48 = scmp.ne.s32.totalorder %s40, %s43
      %p49 = scmp.eq.s32.totalorder %s9, 0
      %p50 = por %p48, %p49
      %p51 = scmp.ne.s32.totalorder %s40, %s43
      %p52 = scmp.eq.s32.totalorder %s14, 1
      %p53 = por %p51, %p52
      %p54 = scmp.ne.s32.totalorder %s43, %s44
      %p55 = scmp.eq.s32.totalorder %s14, 0
      %p56 = por %p54, %p55
      %p57 = scmp.ne.s32.totalorder %s43, %s44
      %p58 = scmp.eq.s32.totalorder %s15, 1
      %p59 = por %p57, %p58
      %p61 = scmp.ne.s32.totalorder %s44, %s60
      %p62 = scmp.eq.s32.totalorder %s15, 0
      %p63 = por %p61, %p62
      %s64 = ssub.s32 %s9, %s16
      %p65 = scmp.eq.s32.totalorder %s64, 0
      %s67 = sadd.s32 %s66, 1
      %s68 = scalar_select %p65, %s66, %s67
      %p71 = pneg %p65
      %p72 = scmp.eq.s32.totalorder %s9, 1
      %p73 = por %p71, %p72
      %p74 = scmp.ne.s32.totalorder %s66, %s69
      %p75 = scmp.eq.s32.totalorder %s9, 0
      %p76 = por %p74, %p75
      %p77 = scmp.ne.s32.totalorder %s66, %s69
      %p78 = scmp.eq.s32.totalorder %s14, 1
      %p79 = por %p77, %p78
      %p80 = scmp.ne.s32.totalorder %s69, %s70
      %p81 = scmp.eq.s32.totalorder %s14, 0
      %p82 = por %p80, %p81
      %p83 = scmp.ne.s32.totalorder %s69, %s70
      %p84 = scmp.eq.s32.totalorder %s15, 1
      %p85 = por %p83, %p84
      %p87 = scmp.ne.s32.totalorder %s70, %s86
      %p88 = scmp.eq.s32.totalorder %s15, 0
      %p89 = por %p87, %p88
      %p90 = scmp.le.s32.totalorder 1, %s9
      %p91 = scmp.lt.s32.totalorder %s9, 3
      %p92 = pnand %p90, %p91
      %p93 = pneg %p92
      // Predicated region
      $region9: #{linear_regression_forward.1} parent=5 // pred_check
        _
      $region10: #{linear_regression_forward.1} parent=5 // pred_check_branch
        %95 = sbr.rel (%p92) target = $region12
      $region11: #{linear_regression_forward.1} parent=5 // pred_region
        %s96 = ssub.s32 %s9, 1
        // Predicated region
        $region13: #{linear_regression_forward.1} parent=11 // pred_check
          %p97 = pneg %p30
        $region14: #{linear_regression_forward.1} parent=11 // pred_check_branch
          %99 = sbr.rel (%p97) target = $region16
        $region15: #{linear_regression_forward.1} parent=11 // pred_region
          %101 = vsyncadd [#allocation3], 0
          %s103 = sshll.u32 %s0, 4
          %s104 = int_to_ptr.vmem [resolvable:$true] %s103
          %106 = dma.vmem_to_smem %s104, 16, [#allocation2], [#allocation3]
        $region16: #{linear_regression_forward.1} parent=11 // pred_fallthru
          _
      $region12: #{linear_regression_forward.1} parent=5 // pred_fallthru
        _
      %p107 = scmp.lt.s32.totalorder %s9, 2
      // Predicated region
      $region17: #{linear_regression_forward.1} parent=5 // pred_check
        %p108 = pneg %p107
      $region18: #{linear_regression_forward.1} parent=5 // pred_check_branch
        %110 = sbr.rel (%p108) target = $region20
      $region19: #{linear_regression_forward.1} parent=5 // pred_region
        // Predicated region
        $region21: #{linear_regression_forward.1} parent=19 // pred_check
          %p111 = pneg %p50
        $region22: #{linear_regression_forward.1} parent=19 // pred_check_branch
          %113 = sbr.rel (%p111) target = $region24
        $region23: #{linear_regression_forward.1} parent=19 // pred_region
          %s114 = sand.u32 %s40, 1
          %s115 = sand.u32 %s40, 1
          %s116 = smul.addr %s115, 64
          %s117 = scalar_lea.vmem [#allocation4], %s116
          %s118 = smul.addr %s9, 4
          %s119 = smul.addr %s118, 8
          %s120 = scalar_lea.vmem %s1, %s119
          // Predicated region
          $region25: #{linear_regression_forward.1} parent=23 // pred_check
            _
          $region26: #{linear_regression_forward.1} parent=23 // pred_check_branch
            %122 = sbr.rel (0) target = $region28
          $region27: #{linear_regression_forward.1} parent=23 // pred_region
            // Predicated region
            $region29: #{linear_regression_forward.1} parent=27 // pred_check
              _
            $region30: #{linear_regression_forward.1} parent=27 // pred_check_branch
              %124 = sbr.rel (0) target = $region32
            $region31: #{linear_regression_forward.1} parent=27 // pred_region
              loop: start=0, step=1, limit=1
              $region33: #{linear_regression_forward.1} parent=31 // loop_pre_header
                _
              $region34: #{linear_regression_forward.1} parent=31 // loop_header
                %s126 = sphi 0, %s130
                %p127 = scmp.ge.s32.totalorder %s126, 1
                %s131 = sphi %s120, %s120
                %s132 = sphi %s117, %s117
              $region35: #{linear_regression_forward.1} parent=31 // loop_header_branch
                %129 = sbr.rel (%p127) target = $region39
              $region36: #{linear_regression_forward.1} parent=31 // loop_body
                %v133 = vld [vmem:[%s131] sm:$0xff]
                %134 = vst [vmem:[%s132] sm:$0xff] %v133
                %v135 = vld [vmem:[%s131 + $0x8] sm:$0xff]
                %136 = vst [vmem:[%s132 + $0x8] sm:$0xff] %v135
                %v137 = vld [vmem:[%s131 + $0x10] sm:$0xff]
                %138 = vst [vmem:[%s132 + $0x10] sm:$0xff] %v137
                %v139 = vld [vmem:[%s131 + $0x18] sm:$0xff]
                %140 = vst [vmem:[%s132 + $0x18] sm:$0xff] %v139
                %v141 = vld [vmem:[%s131 + $0x40] sm:$0xff]
                %142 = vst [vmem:[%s132 + $0x20] sm:$0xff] %v141
                %v143 = vld [vmem:[%s131 + $0x48] sm:$0xff]
                %144 = vst [vmem:[%s132 + $0x28] sm:$0xff] %v143
                %v145 = vld [vmem:[%s131 + $0x50] sm:$0xff]
                %146 = vst [vmem:[%s132 + $0x30] sm:$0xff] %v145
                %v147 = vld [vmem:[%s131 + $0x58] sm:$0xff]
                %148 = vst [vmem:[%s132 + $0x38] sm:$0xff] %v147
              $region37: #{linear_regression_forward.1} parent=31 // loop_footer
                %s130 = sadd.s32 1, %s126
              $region38: #{linear_regression_forward.1} parent=31 // loop_footer_branch
                %125 = sbr.rel target = $region34
              $region39: #{linear_regression_forward.1} parent=31 // loop_exit
                _
            $region32: #{linear_regression_forward.1} parent=27 // pred_fallthru
              _
            // Predicated region
            $region40: #{linear_regression_forward.1} parent=27 // pred_check
              _
            $region41: #{linear_regression_forward.1} parent=27 // pred_check_branch
              %150 = sbr.rel target = $region43
            $region42: #{linear_regression_forward.1} parent=27 // pred_region
              _
            $region43: #{linear_regression_forward.1} parent=27 // pred_fallthru
              _
          $region28: #{linear_regression_forward.1} parent=23 // pred_fallthru
            _
          %151 = vnop
        $region24: #{linear_regression_forward.1} parent=19 // pred_fallthru
          _
      $region20: #{linear_regression_forward.1} parent=5 // pred_fallthru
        _
      %p152 = scmp.le.s32.totalorder 1, %s9
      %p153 = scmp.lt.s32.totalorder %s9, 3
      %p154 = pnand %p152, %p153
      %p155 = pneg %p154
      // Predicated region
      $region44: #{linear_regression_forward.1} parent=5 // pred_check
        _
      $region45: #{linear_regression_forward.1} parent=5 // pred_check_branch
        %157 = sbr.rel (%p154) target = $region47
      $region46: #{linear_regression_forward.1} parent=5 // pred_region
        %s158 = ssub.s32 %s9, 1
        // Predicated region
        $region48: #{linear_regression_forward.1} parent=46 // pred_check
          %p159 = pneg %p30
        $region49: #{linear_regression_forward.1} parent=46 // pred_check_branch
          %161 = sbr.rel (%p159) target = $region51
        $region50: #{linear_regression_forward.1} parent=46 // pred_region
          %163 = dma.done [#allocation3], 16
        $region51: #{linear_regression_forward.1} parent=46 // pred_fallthru
          _
        %s164 = sand.u32 %s43, 1
        %s165 = sand.u32 %s43, 1
        %s166 = smul.addr %s165, 64
        %s167 = scalar_lea.vmem [#allocation4], %s166
        // Predicated region
        $region52: #{linear_regression_forward.1} parent=46 // pred_check
          %p168 = pneg %p56
        $region53: #{linear_regression_forward.1} parent=46 // pred_check_branch
          %170 = sbr.rel (%p168) target = $region55
        $region54: #{linear_regression_forward.1} parent=46 // pred_region
          _
        $region55: #{linear_regression_forward.1} parent=46 // pred_fallthru
          _
        %171 = sfence
        %p172 = pneg %p30
        %p173 = pneg %p27
        %s174 = sand.u32 %s43, 1
        %s175 = sand.u32 %s43, 1
        %s176 = smul.addr %s175, 64
        %s177 = scalar_lea.vmem [#allocation4], %s176
        %p178 = pneg %p56
        %p179 = pneg %p53
        %p180 = pneg %p82
        %p181 = pneg %p79
        %p182 = scmp.lt.s32.totalorder %s14, 1
        %s183 = scalar_select %p182, %s14, 1
        %s184 = smul.addr %s183, 4
        %s185 = smul.addr %s184, 8
        %s186 = scalar_lea.vmem %s2, %s185
        %p187 = scmp.lt.s32.totalorder %s14, 1
        %s188 = scalar_select %p187, %s14, 1
        %s189 = smul.addr %s188, 4
        %s190 = smul.addr %s189, 8
        %s191 = scalar_lea.vmem %s2, %s190
        %s192 = sld [smem:[#allocation2]]
        %s193 = sld [smem:[#allocation2 + $0x1]]
        %s194 = sld [smem:[#allocation2 + $0x2]]
        %v195 = vld [vmem:[%s167] sm:$0xff]
        %v196 = vld [vmem:[%s167 + $0x8] sm:$0xff]
        %v197 = vld [vmem:[%s167 + $0x10] sm:$0xff]
        %v198 = vld [vmem:[%s167 + $0x18] sm:$0xff]
        %v199 = vstv %s192
        %v200 = vmul.f32 %v199, %v195
        %v201 = vmul.f32 %v199, %v196
        %v202 = vmul.f32 %v199, %v197
        %v203 = vmul.f32 %v199, %v198
        %s204 = scalar_lea.vmem %s167, 32 [#allocation4]
        %v205 = vld [vmem:[%s204] sm:$0xff]
        %v206 = vld [vmem:[%s204 + $0x8] sm:$0xff]
        %v207 = vld [vmem:[%s204 + $0x10] sm:$0xff]
        %v208 = vld [vmem:[%s204 + $0x18] sm:$0xff]
        %v209 = vstv %s193
        %v210 = vmul.f32 %v209, %v205
        %v211 = vmul.f32 %v209, %v206
        %v212 = vmul.f32 %v209, %v207
        %v213 = vmul.f32 %v209, %v208
        %v214 = vadd.f32 %v200, %v210
        %v215 = vadd.f32 %v201, %v211
        %v216 = vadd.f32 %v202, %v212
        %v217 = vadd.f32 %v203, %v213
        %v218 = vstv %s194
        %v219 = vadd.f32 %v214, %v218
        %v220 = vadd.f32 %v215, %v218
        %v221 = vadd.f32 %v216, %v218
        %v222 = vadd.f32 %v217, %v218
        %223 = vst [vmem:[%s191] sm:$0xff] %v219
        %224 = vst [vmem:[%s191 + $0x8] sm:$0xff] %v220
        %225 = vst [vmem:[%s191 + $0x10] sm:$0xff] %v221
        %226 = vst [vmem:[%s191 + $0x18] sm:$0xff] %v222
        %p227 = scmp.lt.s32.totalorder %s14, 1
        %s228 = scalar_select %p227, %s14, 1
        %s229 = smul.addr %s228, 4
        %s230 = smul.addr %s229, 8
        %s231 = scalar_lea.vmem %s2, %s230
        // Predicated region
        $region56: #{linear_regression_forward.1} parent=46 // pred_check
          %p232 = pneg %p79
        $region57: #{linear_regression_forward.1} parent=46 // pred_check_branch
          %234 = sbr.rel (%p232) target = $region59
        $region58: #{linear_regression_forward.1} parent=46 // pred_region
          _
        $region59: #{linear_regression_forward.1} parent=46 // pred_fallthru
          _
      $region47: #{linear_regression_forward.1} parent=5 // pred_fallthru
        _
      %p235 = scmp.le.s32.totalorder 2, %s9
      // Predicated region
      $region60: #{linear_regression_forward.1} parent=5 // pred_check
        %p236 = pneg %p235
      $region61: #{linear_regression_forward.1} parent=5 // pred_check_branch
        %238 = sbr.rel (%p236) target = $region63
      $region62: #{linear_regression_forward.1} parent=5 // pred_region
        %s239 = ssub.s32 %s9, 2
        // Predicated region
        $region64: #{linear_regression_forward.1} parent=62 // pred_check
          %p240 = pneg %p85
        $region65: #{linear_regression_forward.1} parent=62 // pred_check_branch
          %242 = sbr.rel (%p240) target = $region67
        $region66: #{linear_regression_forward.1} parent=62 // pred_region
          %p243 = scmp.lt.s32.totalorder %s15, 1
          %s244 = scalar_select %p243, %s15, 1
          %s245 = smul.addr %s244, 4
          %s246 = smul.addr %s245, 8
          %s247 = scalar_lea.vmem %s2, %s246
        $region67: #{linear_regression_forward.1} parent=62 // pred_fallthru
          _
      $region63: #{linear_regression_forward.1} parent=5 // pred_fallthru
        _
    $region6: #{linear_regression_forward.1} parent=1 // loop_footer
      %s13 = sadd.s32 1, %s9
    $region7: #{linear_regression_forward.1} parent=1 // loop_footer_branch
      %8 = sbr.rel target = $region3
    $region8: #{linear_regression_forward.1} parent=1 // loop_exit
      _
    %248 = vsyncpa [#allocation3], 1
    %s249 = scalar_lea.sflag [#allocation3], 1
    %250 = vsyncpa %s249, 1

</llo_original>
